<compile_context>
chip_gen: v7x
topology: tpu7x:2x2x1
jax: 0.10.0
libtpu: 0.0.40
codegen_flags: <defaults>
</compile_context>

<pallas_src>
import jax
import jax.numpy as jnp
from jax.experimental import pallas as pl
from jax.experimental.pallas import tpu as pltpu

LANE = 128
SUBLANE = 8


def _round_up(x: int, m: int) -> int:
    return (x + m - 1) // m * m


def _choose_rows(r_raw: int, c: int) -> int:
    """Rows (of 128 lanes) per spatial tile: ~2 MB f32 pred tile, multiple of 8."""
    if r_raw <= SUBLANE:
        # Block equals the full array dim -> exempt from the (8, 128) rule.
        return r_raw
    max_rows = max(SUBLANE, (2 * 1024 * 1024) // (c * LANE * 4))
    max_rows = max(SUBLANE, (max_rows // SUBLANE) * SUBLANE)
    return min(max_rows, _round_up(r_raw, SUBLANE))


def _dice_kernel(pred_ref, tgt_ref, out_ref):
    """pred_ref: (1, C, rows, 128) f32; tgt_ref: (1, rows, 128) i32.

    out_ref: (1, 3, rows, 128) f32 per-batch per-lane partial sums
             [intersection, sum(pred^2), sum(label^2)], resident across the
             spatial grid axis (accumulator pattern).
    """
    s = pl.program_id(1)
    num_classes = pred_ref.shape[1]

    @pl.when(s == 0)
    def _init():
        out_ref[...] = jnp.zeros_like(out_ref)

    tgt = tgt_ref[0]                                    # (rows, 128) int32

    inter = jnp.zeros(tgt.shape, jnp.float32)
    a_sum = jnp.zeros(tgt.shape, jnp.float32)
    # One-hot rows are 0/1, so sum(label^2) == 1 per in-range pixel, 0 otherwise
    # (matches jax.nn.one_hot; padded pixels use label = -1 -> contribute 0).
    in_range = jnp.logical_and(tgt >= 0, tgt < num_classes)
    b_sum = jnp.where(in_range, 1.0, 0.0)

    for cls in range(num_classes):                      # small C -> static unroll
        p_c = pred_ref[0, cls]                          # (rows, 128) f32
        inter = inter + jnp.where(tgt == cls, p_c, 0.0)
        a_sum = a_sum + p_c * p_c

    out_ref[0, 0] += inter
    out_ref[0, 1] += a_sum
    out_ref[0, 2] += b_sum


def dice_loss(pred: jax.Array, target: jax.Array, num_classes: int) -> jax.Array:
    """pred: (N, C, H, W) float, target: (N, H, W) int -> scalar f32 Dice loss."""
    n, c, h, w = pred.shape
    assert c == num_classes
    hw = h * w

    pred_flat = pred.reshape(n, c, hw).astype(jnp.float32)
    tgt_flat = target.reshape(n, hw).astype(jnp.int32)

    r_raw = -(-hw // LANE)                   # rows of 128 lanes needed
    rows = _choose_rows(r_raw, c)
    r_pad = _round_up(r_raw, rows)
    hw_pad = r_pad * LANE

    if hw_pad != hw:
        # Pad pred with 0 (no contribution) and target with -1 (matches no class).
        pred_flat = jnp.pad(pred_flat, ((0, 0), (0, 0), (0, hw_pad - hw)))
        tgt_flat = jnp.pad(tgt_flat, ((0, 0), (0, hw_pad - hw)), constant_values=-1)

    pred_4d = pred_flat.reshape(n, c, r_pad, LANE)
    tgt_3d = tgt_flat.reshape(n, r_pad, LANE)
    n_spatial = r_pad // rows

    partials = pl.pallas_call(
        _dice_kernel,
        out_shape=jax.ShapeDtypeStruct((n, 3, rows, LANE), jnp.float32),
        grid_spec=pltpu.PrefetchScalarGridSpec(
            num_scalar_prefetch=0,
            grid=(n, n_spatial),
            in_specs=[
                pl.BlockSpec((1, c, rows, LANE), lambda b, s: (b, 0, s, 0)),
                pl.BlockSpec((1, rows, LANE), lambda b, s: (b, s, 0)),
            ],
            out_specs=pl.BlockSpec((1, 3, rows, LANE), lambda b, s: (b, 0, 0, 0)),
        ),
        compiler_params=pltpu.CompilerParams(
            dimension_semantics=("parallel", "arbitrary"),
        ),
    )(pred_4d, tgt_3d)

    sums = jnp.sum(partials, axis=(0, 2, 3))            # (3,): [inter, A, B]
    smooth = 1.0
    return 1.0 - (2.0 * sums[0] + smooth) / (sums[1] + sums[2] + smooth)


def dice_loss_ref(pred: jax.Array, target: jax.Array, num_classes: int) -> jax.Array:
    """Plain-JAX reference mirroring the PyTorch forward."""
    label = jax.nn.one_hot(target, num_classes, dtype=jnp.float32)      # (N,H,W,C)
    label = jnp.transpose(label, (0, 3, 1, 2))                          # (N,C,H,W)
    smooth = 1.0
    iflat = pred.reshape(-1).astype(jnp.float32)
    tflat = label.reshape(-1)
    intersection = jnp.sum(iflat * tflat)
    a_sum = jnp.sum(iflat * iflat)
    b_sum = jnp.sum(tflat * tflat)
    return 1.0 - (2.0 * intersection + smooth) / (a_sum + b_sum + smooth)


if __name__ == "__main__":
    num_classes = 4
    n, h, w = 2, 16, 16

    key = jax.random.PRNGKey(0)
    k_pred, k_tgt = jax.random.split(key)
    logits = jax.random.normal(k_pred, (n, num_classes, h, w), dtype=jnp.float32)
    pred = jax.nn.softmax(logits, axis=1)                       # (N, C, H, W)
    target = jax.random.randint(k_tgt, (n, h, w), 0, num_classes, dtype=jnp.int32)

    loss = dice_loss(pred, target, num_classes)
    loss = jax.block_until_ready(loss)

    ref = dice_loss_ref(pred, target, num_classes)
    assert jnp.allclose(loss, ref, atol=1e-5, rtol=1e-5), (loss, ref)

    print("KERNEL_OK")
</pallas_src>

<mosaic_0001>
module attributes {stable_mosaic.version = 11 : i64} {
  func.func @_dice_kernel(%arg0: i32, %arg1: i32, %arg2: memref<1x4x2x128xf32, #tpu.memory_space<vmem>>, %arg3: memref<1x2x128xi32, #tpu.memory_space<vmem>>, %arg4: memref<1x3x2x128xf32, #tpu.memory_space<vmem>>) attributes {dimension_semantics = [#tpu.dimension_semantics<parallel>, #tpu.dimension_semantics<arbitrary>], iteration_bounds = array<i64: 2, 1>, scalar_prefetch = 0 : i64, scratch_operands = 0 : i64, tpu.core_type = #tpu.core_type<tc>, window_params = [{transform_indices = @transform_0, window_bounds = array<i64: 1, 4, 2, 128>}, {transform_indices = @transform_1, window_bounds = array<i64: 1, 2, 128>}, {transform_indices = @transform_2, window_bounds = array<i64: 1, 3, 2, 128>}]} {
    %c0_i32 = arith.constant 0 : i32
    %0 = arith.cmpi eq, %arg1, %c0_i32 : i32
    %1 = arith.extui %0 : i1 to i32
    %c0_i32_0 = arith.constant 0 : i32
    %2 = arith.cmpi ne, %1, %c0_i32_0 : i32
    scf.if %2 {
      %cst_49 = arith.constant 0.000000e+00 : f32
      %69 = vector.broadcast %cst_49 : f32 to vector<1x3x2x128xf32>
      %c0_50 = arith.constant 0 : index
      %c0_51 = arith.constant 0 : index
      %c0_52 = arith.constant 0 : index
      %c0_53 = arith.constant 0 : index
      %70 = vector.load %arg4[%c0_50, %c0_51, %c0_52, %c0_53] : memref<1x3x2x128xf32, #tpu.memory_space<vmem>>, vector<1x3x2x128xf32>
      tpu.vector_store %arg4[%c0_50, %c0_51, %c0_52, %c0_53], %69 {strides = array<i32>} : memref<1x3x2x128xf32, #tpu.memory_space<vmem>>, vector<1x3x2x128xf32>,
    } else {
    }
    %c0 = arith.constant 0 : index
    %c0_1 = arith.constant 0 : index
    %c0_2 = arith.constant 0 : index
    %3 = vector.load %arg3[%c0, %c0_1, %c0_2] : memref<1x2x128xi32, #tpu.memory_space<vmem>>, vector<1x2x128xi32>
    %4 = vector.shape_cast %3 : vector<1x2x128xi32> to vector<2x128xi32>
    %cst = arith.constant 0.000000e+00 : f32
    %5 = vector.broadcast %cst : f32 to vector<2x128xf32>
    %cst_3 = arith.constant 0.000000e+00 : f32
    %6 = vector.broadcast %cst_3 : f32 to vector<2x128xf32>
    %c0_i32_4 = arith.constant 0 : i32
    %7 = vector.broadcast %c0_i32_4 : i32 to vector<2x128xi32>
    %8 = arith.cmpi sge, %4, %7 : vector<2x128xi32>
    %c4_i32 = arith.constant 4 : i32
    %9 = vector.broadcast %c4_i32 : i32 to vector<2x128xi32>
    %10 = arith.cmpi slt, %4, %9 : vector<2x128xi32>
    %11 = arith.andi %8, %10 : vector<2x128xi1>
    %cst_5 = arith.constant 1.000000e+00 : f32
    %cst_6 = arith.constant 0.000000e+00 : f32
    %12 = vector.broadcast %cst_5 : f32 to vector<2x128xf32>
    %13 = vector.broadcast %cst_6 : f32 to vector<2x128xf32>
    %14 = arith.select %11, %12, %13 : vector<2x128xi1>, vector<2x128xf32>
    %c0_7 = arith.constant 0 : index
    %c0_8 = arith.constant 0 : index
    %c0_9 = arith.constant 0 : index
    %c0_10 = arith.constant 0 : index
    %15 = vector.load %arg2[%c0_7, %c0_8, %c0_9, %c0_10] : memref<1x4x2x128xf32, #tpu.memory_space<vmem>>, vector<1x1x2x128xf32>
    %16 = vector.shape_cast %15 : vector<1x1x2x128xf32> to vector<2x128xf32>
    %c0_i32_11 = arith.constant 0 : i32
    %17 = vector.broadcast %c0_i32_11 : i32 to vector<2x128xi32>
    %18 = arith.cmpi eq, %4, %17 : vector<2x128xi32>
    %cst_12 = arith.constant 0.000000e+00 : f32
    %19 = vector.broadcast %cst_12 : f32 to vector<2x128xf32>
    %20 = arith.select %18, %16, %19 : vector<2x128xi1>, vector<2x128xf32>
    %21 = arith.addf %5, %20 : vector<2x128xf32>
    %22 = arith.mulf %16, %16 : vector<2x128xf32>
    %23 = arith.addf %6, %22 : vector<2x128xf32>
    %c0_13 = arith.constant 0 : index
    %c1 = arith.constant 1 : index
    %c0_14 = arith.constant 0 : index
    %c0_15 = arith.constant 0 : index
    %24 = vector.load %arg2[%c0_13, %c1, %c0_14, %c0_15] : memref<1x4x2x128xf32, #tpu.memory_space<vmem>>, vector<1x1x2x128xf32>
    %25 = vector.shape_cast %24 : vector<1x1x2x128xf32> to vector<2x128xf32>
    %c1_i32 = arith.constant 1 : i32
    %26 = vector.broadcast %c1_i32 : i32 to vector<2x128xi32>
    %27 = arith.cmpi eq, %4, %26 : vector<2x128xi32>
    %cst_16 = arith.constant 0.000000e+00 : f32
    %28 = vector.broadcast %cst_16 : f32 to vector<2x128xf32>
    %29 = arith.select %27, %25, %28 : vector<2x128xi1>, vector<2x128xf32>
    %30 = arith.addf %21, %29 : vector<2x128xf32>
    %31 = arith.mulf %25, %25 : vector<2x128xf32>
    %32 = arith.addf %23, %31 : vector<2x128xf32>
    %c0_17 = arith.constant 0 : index
    %c2 = arith.constant 2 : index
    %c0_18 = arith.constant 0 : index
    %c0_19 = arith.constant 0 : index
    %33 = vector.load %arg2[%c0_17, %c2, %c0_18, %c0_19] : memref<1x4x2x128xf32, #tpu.memory_space<vmem>>, vector<1x1x2x128xf32>
    %34 = vector.shape_cast %33 : vector<1x1x2x128xf32> to vector<2x128xf32>
    %c2_i32 = arith.constant 2 : i32
    %35 = vector.broadcast %c2_i32 : i32 to vector<2x128xi32>
    %36 = arith.cmpi eq, %4, %35 : vector<2x128xi32>
    %cst_20 = arith.constant 0.000000e+00 : f32
    %37 = vector.broadcast %cst_20 : f32 to vector<2x128xf32>
    %38 = arith.select %36, %34, %37 : vector<2x128xi1>, vector<2x128xf32>
    %39 = arith.addf %30, %38 : vector<2x128xf32>
    %40 = arith.mulf %34, %34 : vector<2x128xf32>
    %41 = arith.addf %32, %40 : vector<2x128xf32>
    %c0_21 = arith.constant 0 : index
    %c3 = arith.constant 3 : index
    %c0_22 = arith.constant 0 : index
    %c0_23 = arith.constant 0 : index
    %42 = vector.load %arg2[%c0_21, %c3, %c0_22, %c0_23] : memref<1x4x2x128xf32, #tpu.memory_space<vmem>>, vector<1x1x2x128xf32>
    %43 = vector.shape_cast %42 : vector<1x1x2x128xf32> to vector<2x128xf32>
    %c3_i32 = arith.constant 3 : i32
    %44 = vector.broadcast %c3_i32 : i32 to vector<2x128xi32>
    %45 = arith.cmpi eq, %4, %44 : vector<2x128xi32>
    %cst_24 = arith.constant 0.000000e+00 : f32
    %46 = vector.broadcast %cst_24 : f32 to vector<2x128xf32>
    %47 = arith.select %45, %43, %46 : vector<2x128xi1>, vector<2x128xf32>
    %48 = arith.addf %39, %47 : vector<2x128xf32>
    %49 = arith.mulf %43, %43 : vector<2x128xf32>
    %50 = arith.addf %41, %49 : vector<2x128xf32>
    %c0_25 = arith.constant 0 : index
    %c0_26 = arith.constant 0 : index
    %c0_27 = arith.constant 0 : index
    %c0_28 = arith.constant 0 : index
    %51 = vector.load %arg4[%c0_25, %c0_26, %c0_27, %c0_28] : memref<1x3x2x128xf32, #tpu.memory_space<vmem>>, vector<1x1x2x128xf32>
    %52 = vector.shape_cast %51 : vector<1x1x2x128xf32> to vector<2x128xf32>
    %53 = arith.addf %52, %48 : vector<2x128xf32>
    %c0_29 = arith.constant 0 : index
    %c0_30 = arith.constant 0 : index
    %c0_31 = arith.constant 0 : index
    %c0_32 = arith.constant 0 : index
    %54 = vector.load %arg4[%c0_29, %c0_30, %c0_31, %c0_32] : memref<1x3x2x128xf32, #tpu.memory_space<vmem>>, vector<1x1x2x128xf32>
    %55 = vector.shape_cast %54 : vector<1x1x2x128xf32> to vector<2x128xf32>
    %56 = vector.shape_cast %53 : vector<2x128xf32> to vector<1x1x2x128xf32>
    tpu.vector_store %arg4[%c0_29, %c0_30, %c0_31, %c0_32], %56 {strides = array<i32>} : memref<1x3x2x128xf32, #tpu.memory_space<vmem>>, vector<1x1x2x128xf32>,
    %c0_33 = arith.constant 0 : index
    %c1_34 = arith.constant 1 : index
    %c0_35 = arith.constant 0 : index
    %c0_36 = arith.constant 0 : index
    %57 = vector.load %arg4[%c0_33, %c1_34, %c0_35, %c0_36] : memref<1x3x2x128xf32, #tpu.memory_space<vmem>>, vector<1x1x2x128xf32>
    %58 = vector.shape_cast %57 : vector<1x1x2x128xf32> to vector<2x128xf32>
    %59 = arith.addf %58, %50 : vector<2x128xf32>
    %c0_37 = arith.constant 0 : index
    %c1_38 = arith.constant 1 : index
    %c0_39 = arith.constant 0 : index
    %c0_40 = arith.constant 0 : index
    %60 = vector.load %arg4[%c0_37, %c1_38, %c0_39, %c0_40] : memref<1x3x2x128xf32, #tpu.memory_space<vmem>>, vector<1x1x2x128xf32>
    %61 = vector.shape_cast %60 : vector<1x1x2x128xf32> to vector<2x128xf32>
    %62 = vector.shape_cast %59 : vector<2x128xf32> to vector<1x1x2x128xf32>
    tpu.vector_store %arg4[%c0_37, %c1_38, %c0_39, %c0_40], %62 {strides = array<i32>} : memref<1x3x2x128xf32, #tpu.memory_space<vmem>>, vector<1x1x2x128xf32>,
    %c0_41 = arith.constant 0 : index
    %c2_42 = arith.constant 2 : index
    %c0_43 = arith.constant 0 : index
    %c0_44 = arith.constant 0 : index
    %63 = vector.load %arg4[%c0_41, %c2_42, %c0_43, %c0_44] : memref<1x3x2x128xf32, #tpu.memory_space<vmem>>, vector<1x1x2x128xf32>
    %64 = vector.shape_cast %63 : vector<1x1x2x128xf32> to vector<2x128xf32>
    %65 = arith.addf %64, %14 : vector<2x128xf32>
    %c0_45 = arith.constant 0 : index
    %c2_46 = arith.constant 2 : index
    %c0_47 = arith.constant 0 : index
    %c0_48 = arith.constant 0 : index
    %66 = vector.load %arg4[%c0_45, %c2_46, %c0_47, %c0_48] : memref<1x3x2x128xf32, #tpu.memory_space<vmem>>, vector<1x1x2x128xf32>
    %67 = vector.shape_cast %66 : vector<1x1x2x128xf32> to vector<2x128xf32>
    %68 = vector.shape_cast %65 : vector<2x128xf32> to vector<1x1x2x128xf32>
    tpu.vector_store %arg4[%c0_45, %c2_46, %c0_47, %c0_48], %68 {strides = array<i32>} : memref<1x3x2x128xf32, #tpu.memory_space<vmem>>, vector<1x1x2x128xf32>,
    return
  }
  func.func @transform_0(%arg0: i32, %arg1: i32) -> (i32, i32, i32, i32) {
    %c0_i32 = arith.constant 0 : i32
    %c0_i32_0 = arith.constant 0 : i32
    %c0_i32_1 = arith.constant 0 : i32
    return %arg0, %c0_i32, %arg1, %c0_i32_0 : i32, i32, i32, i32
  }
  func.func @transform_1(%arg0: i32, %arg1: i32) -> (i32, i32, i32) {
    %c0_i32 = arith.constant 0 : i32
    %c0_i32_0 = arith.constant 0 : i32
    return %arg0, %arg1, %c0_i32 : i32, i32, i32
  }
  func.func @transform_2(%arg0: i32, %arg1: i32) -> (i32, i32, i32, i32) {
    %c0_i32 = arith.constant 0 : i32
    %c0_i32_0 = arith.constant 0 : i32
    %c0_i32_1 = arith.constant 0 : i32
    %c0_i32_2 = arith.constant 0 : i32
    return %arg0, %c0_i32, %c0_i32_0, %c0_i32_1 : i32, i32, i32, i32
  }
}

</mosaic_0001>

<llo_original>
// kernel: tpu_custom_call.1
$region0: #{tpu_custom_call.1}
  #allocation0 [shape = 'u32[]', space=smem, size = 0x4, offset = 0x4, fixed_abs, tag = 'smem constant byte address 0x4 - core index']
  #allocation1 [shape = 'u32[144,128]{1,0:T(1,128)}', space=vmem, size = 0x12000, scoped, tag = 'internal scratch']
  %s0 = inlined_call_operand.hbm [shape: f32[2,4,2,128], index: 0, kind: input, shape index: {}]
  %s1 = inlined_call_operand.hbm [shape: s32[2,2,128], index: 1, kind: input, shape index: {}]
  %s2 = inlined_call_operand.hbm [shape: f32[2,3,2,128], index: 2, kind: output, shape index: {}]
  %s3 = sld [smem:[#allocation0]]
  $region53: #{tpu_custom_call.1} parent=0
    _
  %s5 = ssub.s32 1, %s3
  %s6 = scalar_select 0, %s5, %s3
  $region1: #{tpu_custom_call.1} parent=0
    #allocation2 [shape = 'u8[8192]{0}', space=vmem, size = 0x2000, scoped, tag = 'input window, operand 0']
    #allocation3 [shape = 's32[2]{0}', space=sflag, size = 0x8, scoped, tag = 'scoped memory for tpu_custom_call.1']
    #allocation4 [shape = 's32[2]{0}', space=sflag, size = 0x8, scoped, tag = 'scoped memory for tpu_custom_call.1']
    #allocation5 [shape = 'u8[2048]{0}', space=vmem, size = 0x800, scoped, tag = 'input window, operand 1']
    #allocation6 [shape = 's32[2]{0}', space=sflag, size = 0x8, scoped, tag = 'scoped memory for tpu_custom_call.1']
    #allocation7 [shape = 'u8[6144]{0}', space=vmem, size = 0x1800, scoped, tag = 'output window, operand 0']
    %7 = vsyncpa [#allocation3], 0
    %s8 = scalar_lea.sflag [#allocation3], 1
    %9 = vsyncpa %s8, 0
    %10 = vsyncpa [#allocation6], 0
    %s11 = scalar_lea.sflag [#allocation6], 1
    %12 = vsyncpa %s11, 0
    %13 = vsyncpa [#allocation4], 0
    %s14 = scalar_lea.sflag [#allocation4], 1
    %15 = vsyncpa %s14, 0
    loop: start=0, step=1, limit=4
    $region2: #{tpu_custom_call.1} parent=1 // loop_pre_header
      _
    $region3: #{tpu_custom_call.1} parent=1 // loop_header
      %s17 = sphi 0, %s21
      %p18 = scmp.ge.s32.totalorder %s17, 4
      %s24 = sphi 0, %s36
      %s25 = sphi 0, %s32
      %s26 = sphi 0, %s24
      %s27 = sphi 0, %s25
      %s28 = sphi 0, %s26
      %s29 = sphi 0, %s27
      %s41 = sphi 0, %s43
      %s44 = sphi 0, %s41
      %s45 = sphi 0, %s44
      %s61 = sphi 0, %s45
      %s69 = sphi 0, %s71
      %s72 = sphi 0, %s69
      %s73 = sphi 0, %s72
      %s89 = sphi 0, %s73
      %s95 = sphi 0, %s97
      %s98 = sphi 0, %s95
      %s99 = sphi 0, %s98
      %s115 = sphi 0, %s99
    $region4: #{tpu_custom_call.1} parent=1 // loop_header_branch
      %20 = sbr.rel (%p18) target = $region8
    $region5: #{tpu_custom_call.1} parent=1 // loop_body
      %s22 = ssub.s32 %s17, 1
      %s23 = ssub.s32 %s17, 2
      %s30 = sadd.s32 1, %s25
      %p31 = scmp.ge.s32.totalorder %s30, 1
      %s32 = scalar_select %p31, 0, %s30
      %s33 = sadd.s32 1, %s24
      %s34 = scalar_select %p31, %s33, %s24
      %p35 = scmp.ge.s32.totalorder %s34, 2
      %s36 = scalar_select %p35, 0, %s34
      %s37 = ssub.s32 %s24, %s36
      %s38 = ssub.s32 %s25, %s32
      %s39 = sor.u32 %s37, %s38
      %p40 = scmp.eq.s32.totalorder %s39, 0
      %s42 = sadd.s32 %s41, 1
      %s43 = scalar_select %p40, %s41, %s42
      %p46 = pneg %p40
      %p47 = scmp.eq.s32.totalorder %s17, 1
      %p48 = por %p46, %p47
      %p49 = scmp.ne.s32.totalorder %s41, %s44
      %p50 = scmp.eq.s32.totalorder %s17, 0
      %p51 = por %p49, %p50
      %p52 = scmp.ne.s32.totalorder %s41, %s44
      %p53 = scmp.eq.s32.totalorder %s22, 1
      %p54 = por %p52, %p53
      %p55 = scmp.ne.s32.totalorder %s44, %s45
      %p56 = scmp.eq.s32.totalorder %s22, 0
      %p57 = por %p55, %p56
      %p58 = scmp.ne.s32.totalorder %s44, %s45
      %p59 = scmp.eq.s32.totalorder %s23, 1
      %p60 = por %p58, %p59
      %p62 = scmp.ne.s32.totalorder %s45, %s61
      %p63 = scmp.eq.s32.totalorder %s23, 0
      %p64 = por %p62, %p63
      %s65 = ssub.s32 %s24, %s36
      %s66 = ssub.s32 %s25, %s32
      %s67 = sor.u32 %s65, %s66
      %p68 = scmp.eq.s32.totalorder %s67, 0
      %s70 = sadd.s32 %s69, 1
      %s71 = scalar_select %p68, %s69, %s70
      %p74 = pneg %p68
      %p75 = scmp.eq.s32.totalorder %s17, 1
      %p76 = por %p74, %p75
      %p77 = scmp.ne.s32.totalorder %s69, %s72
      %p78 = scmp.eq.s32.totalorder %s17, 0
      %p79 = por %p77, %p78
      %p80 = scmp.ne.s32.totalorder %s69, %s72
      %p81 = scmp.eq.s32.totalorder %s22, 1
      %p82 = por %p80, %p81
      %p83 = scmp.ne.s32.totalorder %s72, %s73
      %p84 = scmp.eq.s32.totalorder %s22, 0
      %p85 = por %p83, %p84
      %p86 = scmp.ne.s32.totalorder %s72, %s73
      %p87 = scmp.eq.s32.totalorder %s23, 1
      %p88 = por %p86, %p87
      %p90 = scmp.ne.s32.totalorder %s73, %s89
      %p91 = scmp.eq.s32.totalorder %s23, 0
      %p92 = por %p90, %p91
      %s93 = ssub.s32 %s24, %s36
      %p94 = scmp.eq.s32.totalorder %s93, 0
      %s96 = sadd.s32 %s95, 1
      %s97 = scalar_select %p94, %s95, %s96
      %p100 = pneg %p94
      %p101 = scmp.eq.s32.totalorder %s17, 1
      %p102 = por %p100, %p101
      %p103 = scmp.ne.s32.totalorder %s95, %s98
      %p104 = scmp.eq.s32.totalorder %s17, 0
      %p105 = por %p103, %p104
      %p106 = scmp.ne.s32.totalorder %s95, %s98
      %p107 = scmp.eq.s32.totalorder %s22, 1
      %p108 = por %p106, %p107
      %p109 = scmp.ne.s32.totalorder %s98, %s99
      %p110 = scmp.eq.s32.totalorder %s22, 0
      %p111 = por %p109, %p110
      %p112 = scmp.ne.s32.totalorder %s98, %s99
      %p113 = scmp.eq.s32.totalorder %s23, 1
      %p114 = por %p112, %p113
      %p116 = scmp.ne.s32.totalorder %s99, %s115
      %p117 = scmp.eq.s32.totalorder %s23, 0
      %p118 = por %p116, %p117
      %p119 = scmp.le.s32.totalorder 1, %s17
      %p120 = scmp.lt.s32.totalorder %s17, 3
      %p121 = pnand %p119, %p120
      %p122 = pneg %p121
      // Predicated region
      $region9: #{tpu_custom_call.1} parent=5 // pred_check
        _
      $region10: #{tpu_custom_call.1} parent=5 // pred_check_branch
        %124 = sbr.rel (%p121) target = $region12
      $region11: #{tpu_custom_call.1} parent=5 // pred_region
        %s125 = ssub.s32 %s17, 1
      $region12: #{tpu_custom_call.1} parent=5 // pred_fallthru
        _
      %p126 = scmp.lt.s32.totalorder %s17, 2
      // Predicated region
      $region13: #{tpu_custom_call.1} parent=5 // pred_check
        %p127 = pneg %p126
      $region14: #{tpu_custom_call.1} parent=5 // pred_check_branch
        %129 = sbr.rel (%p127) target = $region16
      $region15: #{tpu_custom_call.1} parent=5 // pred_region
        // Predicated region
        $region17: #{tpu_custom_call.1} parent=15 // pred_check
          %p130 = pneg %p51
        $region18: #{tpu_custom_call.1} parent=15 // pred_check_branch
          %132 = sbr.rel (%p130) target = $region20
        $region19: #{tpu_custom_call.1} parent=15 // pred_region
          %s133 = sand.u32 %s41, 1
          %s134 = scalar_lea.sflag [#allocation3], %s133
          %s135 = sand.u32 %s41, 1
          %s136 = smul.addr %s135, 8
          %s137 = scalar_lea.vmem [#allocation2], %s136
          %s139 = ssub.s32 128, 128
          %140 = vsyncadd %s134, %s139
          %s141 = smul.addr %s24, 4
          %s142 = sadd.s32 %s25, %s141
          %s143 = smul.addr %s142, 32
          %s144 = scalar_lea.hbm %s0, %s143
          %s145 = sshll.u32 %s137, 4
          %s146 = int_to_ptr.vmem [resolvable:$true] %s145
          %151 = dma.hbm_to_vmem [thread:$0]  %s144, 128, %s146, %s134, 32, 32, 2
        $region20: #{tpu_custom_call.1} parent=15 // pred_fallthru
          _
        // Predicated region
        $region21: #{tpu_custom_call.1} parent=15 // pred_check
          %p152 = pneg %p79
        $region22: #{tpu_custom_call.1} parent=15 // pred_check_branch
          %154 = sbr.rel (%p152) target = $region24
        $region23: #{tpu_custom_call.1} parent=15 // pred_region
          %s155 = sand.u32 %s69, 1
          %s156 = scalar_lea.sflag [#allocation6], %s155
          %s157 = sand.u32 %s69, 1
          %s158 = smul.addr %s157, 2
          %s159 = scalar_lea.vmem [#allocation5], %s158
          %s161 = ssub.s32 32, 32
          %162 = vsyncadd %s156, %s161
          %s163 = sadd.s32 %s25, %s24
          %s164 = smul.addr %s163, 32
          %s165 = scalar_lea.hbm %s1, %s164
          %s167 = sshll.u32 %s159, 4
          %s168 = int_to_ptr.vmem [resolvable:$true] %s167
          %170 = dma.hbm_to_vmem [thread:$0]  %s165, 32, %s168, %s156
        $region24: #{tpu_custom_call.1} parent=15 // pred_fallthru
          _
      $region16: #{tpu_custom_call.1} parent=5 // pred_fallthru
        _
      %p171 = scmp.le.s32.totalorder 1, %s17
      %p172 = scmp.lt.s32.totalorder %s17, 3
      %p173 = pnand %p171, %p172
      %p174 = pneg %p173
      // Predicated region
      $region25: #{tpu_custom_call.1} parent=5 // pred_check
        _
      $region26: #{tpu_custom_call.1} parent=5 // pred_check_branch
        %176 = sbr.rel (%p173) target = $region28
      $region27: #{tpu_custom_call.1} parent=5 // pred_region
        %s177 = ssub.s32 %s17, 1
        %s178 = sand.u32 %s44, 1
        %s179 = scalar_lea.sflag [#allocation3], %s178
        %s180 = sand.u32 %s44, 1
        %s181 = smul.addr %s180, 8
        %s182 = scalar_lea.vmem [#allocation2], %s181
        // Predicated region
        $region29: #{tpu_custom_call.1} parent=27 // pred_check
          %p183 = pneg %p57
        $region30: #{tpu_custom_call.1} parent=27 // pred_check_branch
          %185 = sbr.rel (%p183) target = $region32
        $region31: #{tpu_custom_call.1} parent=27 // pred_region
          %186 = dma.done %s179, 128
        $region32: #{tpu_custom_call.1} parent=27 // pred_fallthru
          _
        %s187 = sand.u32 %s72, 1
        %s188 = scalar_lea.sflag [#allocation6], %s187
        %s189 = sand.u32 %s72, 1
        %s190 = smul.addr %s189, 2
        %s191 = scalar_lea.vmem [#allocation5], %s190
        // Predicated region
        $region33: #{tpu_custom_call.1} parent=27 // pred_check
          %p192 = pneg %p85
        $region34: #{tpu_custom_call.1} parent=27 // pred_check_branch
          %194 = sbr.rel (%p192) target = $region36
        $region35: #{tpu_custom_call.1} parent=27 // pred_region
          %195 = dma.done %s188, 32
        $region36: #{tpu_custom_call.1} parent=27 // pred_fallthru
          _
        %s196 = sand.u32 %s44, 1
        %s197 = scalar_lea.sflag [#allocation3], %s196
        %s198 = sand.u32 %s44, 1
        %s199 = smul.addr %s198, 8
        %s200 = scalar_lea.vmem [#allocation2], %s199
        %p201 = pneg %p57
        %p202 = pneg %p54
        %s203 = sand.u32 %s72, 1
        %s204 = scalar_lea.sflag [#allocation6], %s203
        %s205 = sand.u32 %s72, 1
        %s206 = smul.addr %s205, 2
        %s207 = scalar_lea.vmem [#allocation5], %s206
        %p208 = pneg %p85
        %p209 = pneg %p82
        %p210 = pneg %p111
        %p211 = pneg %p108
        %s212 = sand.u32 %s98, 1
        %s213 = scalar_lea.sflag [#allocation4], %s212
        %s214 = sand.u32 %s98, 1
        %s215 = smul.addr %s214, 6
        %s216 = scalar_lea.vmem [#allocation7], %s215
        %p217 = scmp.eq.s32.totalorder %s27, 0
        // Predicated region
        $region37: #{tpu_custom_call.1} parent=27 // pred_check
          %p218 = pneg %p217
        $region38: #{tpu_custom_call.1} parent=27 // pred_check_branch
          %220 = sbr.rel (%p218) target = $region40
        $region39: #{tpu_custom_call.1} parent=27 // pred_region
          %221 = vst [vmem:[%s216] sm:$0x3] 0.0
          %222 = vst [vmem:[%s216 + $0x2] sm:$0x3] 0.0
          %223 = vst [vmem:[%s216 + $0x4] sm:$0x3] 0.0
        $region40: #{tpu_custom_call.1} parent=27 // pred_fallthru
          _
        %v224 = vld [vmem:[%s191] sm:$0x3]
        %vm225 = vcmp.ge.s32.totalorder %v224, 0
        %vm226 = vcmp.lt.s32.totalorder %v224, 4
        %vm227 = vmand %vm225, %vm226
        %v228 = vsel %vm227, 1.0, 0.0
        %v229 = vld [vmem:[%s182] sm:$0x3]
        %vm230 = vcmp.eq.s32.totalorder %v224, 0
        %v231 = vsel %vm230, %v229, 0.0
        %v232 = vadd.f32 %v231, 0.0
        %v233 = vmul.f32 %v229, %v229
        %v234 = vadd.f32 %v233, 0.0
        %s235 = scalar_lea.vmem %s182, 2 [#allocation2]
        %v236 = vld [vmem:[%s235] sm:$0x3]
        %vm237 = vcmp.eq.s32.totalorder %v224, 1
        %v238 = vsel %vm237, %v236, 0.0
        %v239 = vadd.f32 %v232, %v238
        %v240 = vmul.f32 %v236, %v236
        %v241 = vadd.f32 %v234, %v240
        %s242 = scalar_lea.vmem %s182, 4 [#allocation2]
        %v243 = vld [vmem:[%s242] sm:$0x3]
        %vm244 = vcmp.eq.s32.totalorder %v224, 2
        %v245 = vsel %vm244, %v243, 0.0
        %v246 = vadd.f32 %v239, %v245
        %v247 = vmul.f32 %v243, %v243
        %v248 = vadd.f32 %v241, %v247
        %s249 = scalar_lea.vmem %s182, 6 [#allocation2]
        %v250 = vld [vmem:[%s249] sm:$0x3]
        %vm251 = vcmp.eq.s32.totalorder %v224, 3
        %v252 = vsel %vm251, %v250, 0.0
        %v253 = vadd.f32 %v246, %v252
        %v254 = vmul.f32 %v250, %v250
        %v255 = vadd.f32 %v248, %v254
        %v256 = vld [vmem:[%s216] sm:$0x3]
        %v257 = vadd.f32 %v256, %v253
        %258 = vst [vmem:[%s216] sm:$0x3] %v257
        %s259 = scalar_lea.vmem %s216, 2 [#allocation7]
        %v260 = vld [vmem:[%s259] sm:$0x3]
        %v261 = vadd.f32 %v260, %v255
        %262 = vst [vmem:[%s259] sm:$0x3] %v261
        %s263 = scalar_lea.vmem %s216, 4 [#allocation7]
        %v264 = vld [vmem:[%s263] sm:$0x3]
        %v265 = vadd.f32 %v264, %v228
        %266 = vst [vmem:[%s263] sm:$0x3] %v265
        %s267 = sand.u32 %s98, 1
        %s268 = scalar_lea.sflag [#allocation4], %s267
        %s269 = sand.u32 %s98, 1
        %s270 = smul.addr %s269, 6
        %s271 = scalar_lea.vmem [#allocation7], %s270
        // Predicated region
        $region41: #{tpu_custom_call.1} parent=27 // pred_check
          %p272 = pneg %p108
        $region42: #{tpu_custom_call.1} parent=27 // pred_check_branch
          %274 = sbr.rel (%p272) target = $region44
        $region43: #{tpu_custom_call.1} parent=27 // pred_region
          %s276 = ssub.s32 96, 96
          %277 = vsyncadd %s268, %s276
          %s278 = smul.addr %s26, 3
          %s279 = smul.addr %s278, 32
          %s280 = scalar_lea.hbm %s2, %s279
          %s281 = sshll.u32 %s271, 4
          %s282 = int_to_ptr.vmem [resolvable:$true] %s281
          %287 = dma.vmem_to_hbm [thread:$0]  %s282, 96, %s280, %s268, 32, 32, 2
        $region44: #{tpu_custom_call.1} parent=27 // pred_fallthru
          _
      $region28: #{tpu_custom_call.1} parent=5 // pred_fallthru
        _
      %p288 = scmp.le.s32.totalorder 2, %s17
      // Predicated region
      $region45: #{tpu_custom_call.1} parent=5 // pred_check
        %p289 = pneg %p288
      $region46: #{tpu_custom_call.1} parent=5 // pred_check_branch
        %291 = sbr.rel (%p289) target = $region48
      $region47: #{tpu_custom_call.1} parent=5 // pred_region
        %s292 = ssub.s32 %s17, 2
        // Predicated region
        $region49: #{tpu_custom_call.1} parent=47 // pred_check
          %p293 = pneg %p114
        $region50: #{tpu_custom_call.1} parent=47 // pred_check_branch
          %295 = sbr.rel (%p293) target = $region52
        $region51: #{tpu_custom_call.1} parent=47 // pred_region
          %s296 = sand.u32 %s99, 1
          %s297 = scalar_lea.sflag [#allocation4], %s296
          %s298 = sand.u32 %s99, 1
          %s299 = smul.addr %s298, 6
          %s300 = scalar_lea.vmem [#allocation7], %s299
          %301 = dma.done %s297, 96
        $region52: #{tpu_custom_call.1} parent=47 // pred_fallthru
          _
      $region48: #{tpu_custom_call.1} parent=5 // pred_fallthru
        _
    $region6: #{tpu_custom_call.1} parent=1 // loop_footer
      %s21 = sadd.s32 1, %s17
    $region7: #{tpu_custom_call.1} parent=1 // loop_footer_branch
      %16 = sbr.rel target = $region3
    $region8: #{tpu_custom_call.1} parent=1 // loop_exit
      _
    %302 = vsyncpa [#allocation3], 1
    %s303 = scalar_lea.sflag [#allocation3], 1
    %304 = vsyncpa %s303, 1
    %305 = vsyncpa [#allocation6], 1
    %s306 = scalar_lea.sflag [#allocation6], 1
    %307 = vsyncpa %s306, 1
    %308 = vsyncpa [#allocation4], 1
    %s309 = scalar_lea.sflag [#allocation4], 1
    %310 = vsyncpa %s309, 1

</llo_original>
